<compile_context>
chip_gen: v6e
topology: v6e:2x2x1
jax: 0.10.0
libtpu: 0.0.40
codegen_flags: <defaults>
</compile_context>

<pallas_src>
import jax
import jax.numpy as jnp
from jax.experimental import pallas as pl
from jax.experimental.pallas import tpu as pltpu

# ----- hyperparameters (the "args" of MolGraphNet) -----
ATOM_FDIM = 16     # atom feature dim
N_ATOMS = 16       # atoms per molecule (padded / fixed)
HIDDEN = 32        # args.hidden_size
DEPTH = 3          # MPN message-passing depth
FFN_HIDDEN = 32    # args.ffn_hidden_size
NUM_TASKS = 4      # args.num_tasks (output_size)
BATCH = 2
CLASSIFICATION = True   # args.dataset_type == 'classification', eval mode -> sigmoid

OUT_PAD = 128      # lane-dense output width (NUM_TASKS padded to a full lane tile)


def mol_graph_kernel(atoms_ref, adj_ref, pool_ref,
                     w_in_ref, w_out_ref, wh_ref, wo_h_ref,
                     w1_ref, w2_ref, b12_ref,
                     out_ref):
    x = atoms_ref[...]                      # (gn, F+1)   flattened atoms, last col == 1
    a = adj_ref[...]                        # (group, N, N)
    group, n_atoms, _ = a.shape
    gn = group * n_atoms

    # --- MPN encoder (all molecules of the group in one slab) ---
    # Two separate 2-D matmuls on the resident x (avoids mid-vreg lane slices).
    h0 = jnp.maximum(
        jnp.dot(x, w_in_ref[...], preferred_element_type=jnp.float32), 0.0)      # ReLU(X @ W_i)
    x_out = jnp.dot(x, w_out_ref[...], preferred_element_type=jnp.float32)       # X @ W_o_atom + b_o

    h = h0
    for _ in range(DEPTH - 1):
        # batched neighbor aggregation: (group, N, N) @ (group, N, H)
        msg3 = jnp.einsum('gnm,gmh->gnh', a, h.reshape(group, n_atoms, HIDDEN),
                          preferred_element_type=jnp.float32)
        h = jnp.maximum(
            h0 + jnp.dot(msg3.reshape(gn, HIDDEN), wh_ref[...],
                         preferred_element_type=jnp.float32), 0.0)

    atom_h = jnp.maximum(
        x_out + jnp.dot(h, wo_h_ref[...], preferred_element_type=jnp.float32), 0.0)  # (gn, H)

    # mean readout as a matmul with the precomputed pooling matrix (group, gn)
    mol = jnp.dot(pool_ref[...], atom_h, preferred_element_type=jnp.float32)     # (group, H)

    # --- FFN for the whole group (lane-padded to 128 output columns, exact) ---
    b12 = b12_ref[...]                       # (2, 128): row 0 = b1 (padded), row 1 = b2 (padded)
    z = jnp.maximum(
        jnp.dot(mol, w1_ref[...], preferred_element_type=jnp.float32) + b12[0:1, :], 0.0)
    z = jnp.dot(z, w2_ref[...], preferred_element_type=jnp.float32) + b12[1:2, :]

    if CLASSIFICATION:                       # eval mode -> sigmoid
        z = jax.nn.sigmoid(z)

    out_ref[...] = z                         # single lane-dense (group, 128) store


def mol_graph_net(atoms, adj, params):
    B, N, F = atoms.shape
    wi, wh, wo_a, wo_h, bo, w1, b1, w2, b2 = params

    # ---- group selection: overhead-bound kernel -> biggest slab per grid step ----
    # With the (group, N, N) adjacency the per-step working set is ~ gn*(F+1) +
    # group*N^2 + group*gn floats plus tiny weights: a 1024-row slab double-buffers
    # in well under 8 MiB, safe on every generation (incl. v7x's 64 MiB VMEM).
    GN_CAP = 1024
    cap = max(1, GN_CAP // N)
    if B <= cap:
        group = B                 # one grid step (best on 1-TC v5e/v6e)
    else:
        group = max(8, (cap // 8) * 8)   # multiple of 8 keeps all blocks sublane-aligned
    # TODO(synk): on v7x (2 TensorCores) pick group so ng >= 2 for large batches;
    # at this toy batch size ng == 1 and only one core is engaged.
    B_pad = -(-B // group) * group
    ng = B_pad // group
    gn = group * N

    if B_pad != B:                # zero-pad the batch so every group is full
        pad = B_pad - B
        atoms = jnp.concatenate([atoms, jnp.zeros((pad, N, F), atoms.dtype)], axis=0)
        adj = jnp.concatenate([adj, jnp.zeros((pad, N, N), adj.dtype)], axis=0)

    # ---- host-side packing (layout plumbing, not compute hoisting) ----
    # constant-1 feature column -> b_o folds into the output-layer weight
    atoms_aug = jnp.concatenate(
        [atoms.reshape(B_pad * N, F), jnp.ones((B_pad * N, 1), jnp.float32)], axis=1)  # (B_pad*N, F+1)

    w_in = jnp.concatenate([wi, jnp.zeros((1, HIDDEN), jnp.float32)], axis=0)   # (F+1, H), W_i has no bias
    w_out = jnp.concatenate([wo_a, bo], axis=0)                                 # (F+1, H), b_o folded in

    # FFN weights padded to 128 lanes so the output store is lane-dense (exact: pads are zero)
    w1p = jnp.zeros((HIDDEN, OUT_PAD), jnp.float32).at[:, :FFN_HIDDEN].set(w1)
    w2p = jnp.zeros((OUT_PAD, OUT_PAD), jnp.float32).at[:FFN_HIDDEN, :NUM_TASKS].set(w2)
    b12 = jnp.zeros((2, OUT_PAD), jnp.float32)
    b12 = b12.at[0, :FFN_HIDDEN].set(b1[0])
    b12 = b12.at[1, :NUM_TASKS].set(b2[0])

    # mean-readout pooling matrix, shared across groups
    pool = jnp.kron(jnp.eye(group, dtype=jnp.float32),
                    jnp.ones((1, N), jnp.float32)) / float(N)                   # (group, gn)

    full = lambda arr: pl.BlockSpec(arr.shape, lambda g, _n=arr.ndim: (0,) * _n)

    out = pl.pallas_call(
        mol_graph_kernel,
        out_shape=jax.ShapeDtypeStruct((B_pad, OUT_PAD), jnp.float32),
        grid_spec=pltpu.PrefetchScalarGridSpec(
            num_scalar_prefetch=0,
            grid=(ng,),
            in_specs=[
                pl.BlockSpec((gn, F + 1), lambda g: (g, 0)),       # flattened atom features (+1 col)
                pl.BlockSpec((group, N, N), lambda g: (g, 0, 0)),  # per-molecule adjacency block
                full(pool),
                full(w_in), full(w_out), full(wh), full(wo_h),
                full(w1p), full(w2p), full(b12),
            ],
            out_specs=pl.BlockSpec((group, OUT_PAD), lambda g: (g, 0)),
        ),
        compiler_params=pltpu.CompilerParams(dimension_semantics=("parallel",)),
    )(atoms_aug, adj, pool, w_in, w_out, wh, wo_h, w1p, w2p, b12)

    return out[:B, :NUM_TASKS]   # (B, NUM_TASKS)


def init_params(key):
    ks = jax.random.split(key, 9)
    scale = 0.1
    wi = scale * jax.random.normal(ks[0], (ATOM_FDIM, HIDDEN), jnp.float32)      # W_i (no bias)
    wh = scale * jax.random.normal(ks[1], (HIDDEN, HIDDEN), jnp.float32)         # W_h (no bias)
    wo_a = scale * jax.random.normal(ks[2], (ATOM_FDIM, HIDDEN), jnp.float32)    # W_o[:F]
    wo_h = scale * jax.random.normal(ks[3], (HIDDEN, HIDDEN), jnp.float32)       # W_o[F:]
    bo = scale * jax.random.normal(ks[4], (1, HIDDEN), jnp.float32)              # W_o bias
    w1 = scale * jax.random.normal(ks[5], (HIDDEN, FFN_HIDDEN), jnp.float32)     # FFN linear 1
    b1 = scale * jax.random.normal(ks[6], (1, FFN_HIDDEN), jnp.float32)
    w2 = scale * jax.random.normal(ks[7], (FFN_HIDDEN, NUM_TASKS), jnp.float32)  # FFN linear 2
    b2 = scale * jax.random.normal(ks[8], (1, NUM_TASKS), jnp.float32)
    return (wi, wh, wo_a, wo_h, bo, w1, b1, w2, b2)


def _ref_forward(atoms, adj, params):
    """Pure-JAX reference of the same dense MPN + FFN forward (for validation)."""
    wi, wh, wo_a, wo_h, bo, w1, b1, w2, b2 = params
    h0 = jax.nn.relu(jnp.einsum('bnf,fh->bnh', atoms, wi))
    h = h0
    for _ in range(DEPTH - 1):
        msg = jnp.einsum('bnm,bmh->bnh', adj, h)
        h = jax.nn.relu(h0 + jnp.einsum('bnh,hk->bnk', msg, wh))
    atom_h = jax.nn.relu(jnp.einsum('bnf,fh->bnh', atoms, wo_a)
                         + jnp.einsum('bnh,hk->bnk', h, wo_h) + bo)
    mol = atom_h.mean(axis=1)
    z = jax.nn.relu(mol @ w1 + b1) @ w2 + b2
    return jax.nn.sigmoid(z) if CLASSIFICATION else z


if __name__ == "__main__":
    key = jax.random.PRNGKey(0)
    k_atoms, k_adj, k_params = jax.random.split(key, 3)

    # deterministic synthetic molecular "batch"
    atoms = jax.random.normal(k_atoms, (BATCH, N_ATOMS, ATOM_FDIM), jnp.float32)
    # symmetric 0/1 adjacency, no self loops
    raw = jax.random.uniform(k_adj, (BATCH, N_ATOMS, N_ATOMS))
    adj = (raw + jnp.swapaxes(raw, -1, -2) > 1.2).astype(jnp.float32)
    adj = adj * (1.0 - jnp.eye(N_ATOMS, dtype=jnp.float32)[None])

    params = init_params(k_params)

    out = mol_graph_net(atoms, adj, params)
    out = jax.block_until_ready(out)
    assert out.shape == (BATCH, NUM_TASKS)
    assert bool(jnp.all(jnp.isfinite(out)))

    ref = _ref_forward(atoms, adj, params)
    assert bool(jnp.all(jnp.abs(out - ref) < 1e-4)), "kernel does not match JAX reference"

    print("KERNEL_OK")
</pallas_src>

<mosaic_0001>
module attributes {stable_mosaic.version = 11 : i64} {
  func.func @mol_graph_kernel(%arg0: i32, %arg1: memref<32x17xf32, #tpu.memory_space<vmem>>, %arg2: memref<2x16x16xf32, #tpu.memory_space<vmem>>, %arg3: memref<2x32xf32, #tpu.memory_space<vmem>>, %arg4: memref<17x32xf32, #tpu.memory_space<vmem>>, %arg5: memref<17x32xf32, #tpu.memory_space<vmem>>, %arg6: memref<32x32xf32, #tpu.memory_space<vmem>>, %arg7: memref<32x32xf32, #tpu.memory_space<vmem>>, %arg8: memref<32x128xf32, #tpu.memory_space<vmem>>, %arg9: memref<128x128xf32, #tpu.memory_space<vmem>>, %arg10: memref<2x128xf32, #tpu.memory_space<vmem>>, %arg11: memref<2x128xf32, #tpu.memory_space<vmem>>) attributes {dimension_semantics = [#tpu.dimension_semantics<parallel>], iteration_bounds = array<i64: 1>, scalar_prefetch = 0 : i64, scratch_operands = 0 : i64, tpu.core_type = #tpu.core_type<tc>, window_params = [{transform_indices = @transform_0, window_bounds = array<i64: 32, 17>}, {transform_indices = @transform_1, window_bounds = array<i64: 2, 16, 16>}, {pipeline_mode = #tpu.pipeline_mode<synchronous>, transform_indices = @transform_2, window_bounds = array<i64: 2, 32>}, {pipeline_mode = #tpu.pipeline_mode<synchronous>, transform_indices = @transform_3, window_bounds = array<i64: 17, 32>}, {pipeline_mode = #tpu.pipeline_mode<synchronous>, transform_indices = @transform_4, window_bounds = array<i64: 17, 32>}, {pipeline_mode = #tpu.pipeline_mode<synchronous>, transform_indices = @transform_5, window_bounds = array<i64: 32, 32>}, {pipeline_mode = #tpu.pipeline_mode<synchronous>, transform_indices = @transform_6, window_bounds = array<i64: 32, 32>}, {pipeline_mode = #tpu.pipeline_mode<synchronous>, transform_indices = @transform_7, window_bounds = array<i64: 32, 128>}, {pipeline_mode = #tpu.pipeline_mode<synchronous>, transform_indices = @transform_8, window_bounds = array<i64: 128, 128>}, {pipeline_mode = #tpu.pipeline_mode<synchronous>, transform_indices = @transform_9, window_bounds = array<i64: 2, 128>}, {transform_indices = @transform_10, window_bounds = array<i64: 2, 128>}]} {
    %c0 = arith.constant 0 : index
    %c0_0 = arith.constant 0 : index
    %0 = vector.load %arg1[%c0, %c0_0] : memref<32x17xf32, #tpu.memory_space<vmem>>, vector<32x17xf32>
    %c0_1 = arith.constant 0 : index
    %c0_2 = arith.constant 0 : index
    %c0_3 = arith.constant 0 : index
    %1 = vector.load %arg2[%c0_1, %c0_2, %c0_3] : memref<2x16x16xf32, #tpu.memory_space<vmem>>, vector<2x16x16xf32>
    %c0_4 = arith.constant 0 : index
    %c0_5 = arith.constant 0 : index
    %2 = vector.load %arg4[%c0_4, %c0_5] : memref<17x32xf32, #tpu.memory_space<vmem>>, vector<17x32xf32>
    %cst = arith.constant dense<0.000000e+00> : vector<32x32xf32>
    %3 = tpu.matmul %0, %2, %cst {dimension_numbers = #tpu.dot_dimension_numbers<[1], [0], [0], [1], [0, 0, 1, 1], [], []>} : vector<32x17xf32>, vector<17x32xf32>, vector<32x32xf32> -> vector<32x32xf32>
    %cst_6 = arith.constant 0.000000e+00 : f32
    %4 = vector.broadcast %cst_6 : f32 to vector<32x32xf32>
    %5 = arith.maximumf %3, %4 : vector<32x32xf32>
    %c0_7 = arith.constant 0 : index
    %c0_8 = arith.constant 0 : index
    %6 = vector.load %arg5[%c0_7, %c0_8] : memref<17x32xf32, #tpu.memory_space<vmem>>, vector<17x32xf32>
    %cst_9 = arith.constant dense<0.000000e+00> : vector<32x32xf32>
    %7 = tpu.matmul %0, %6, %cst_9 {dimension_numbers = #tpu.dot_dimension_numbers<[1], [0], [0], [1], [0, 0, 1, 1], [], []>} : vector<32x17xf32>, vector<17x32xf32>, vector<32x32xf32> -> vector<32x32xf32>
    %8 = vector.shape_cast %5 : vector<32x32xf32> to vector<2x16x32xf32>
    "tpu.trace_start"() <{level = 10 : i32, message = "gnm,gmh->gnh"}> : () -> ()
    %cst_10 = arith.constant dense<0.000000e+00> : vector<2x16x32xf32>
    %9 = tpu.matmul %1, %8, %cst_10 {dimension_numbers = #tpu.dot_dimension_numbers<[2], [1], [1], [2], [0, 0, 0, 1, 1, 2], [0], [0]>} : vector<2x16x16xf32>, vector<2x16x32xf32>, vector<2x16x32xf32> -> vector<2x16x32xf32>
    "tpu.trace_stop"() : () -> ()
    %10 = vector.shape_cast %9 : vector<2x16x32xf32> to vector<32x32xf32>
    %c0_11 = arith.constant 0 : index
    %c0_12 = arith.constant 0 : index
    %11 = vector.load %arg6[%c0_11, %c0_12] : memref<32x32xf32, #tpu.memory_space<vmem>>, vector<32x32xf32>
    %cst_13 = arith.constant dense<0.000000e+00> : vector<32x32xf32>
    %12 = tpu.matmul %10, %11, %cst_13 {dimension_numbers = #tpu.dot_dimension_numbers<[1], [0], [0], [1], [0, 0, 1, 1], [], []>} : vector<32x32xf32>, vector<32x32xf32>, vector<32x32xf32> -> vector<32x32xf32>
    %13 = arith.addf %5, %12 : vector<32x32xf32>
    %cst_14 = arith.constant 0.000000e+00 : f32
    %14 = vector.broadcast %cst_14 : f32 to vector<32x32xf32>
    %15 = arith.maximumf %13, %14 : vector<32x32xf32>
    %16 = vector.shape_cast %15 : vector<32x32xf32> to vector<2x16x32xf32>
    "tpu.trace_start"() <{level = 10 : i32, message = "gnm,gmh->gnh"}> : () -> ()
    %cst_15 = arith.constant dense<0.000000e+00> : vector<2x16x32xf32>
    %17 = tpu.matmul %1, %16, %cst_15 {dimension_numbers = #tpu.dot_dimension_numbers<[2], [1], [1], [2], [0, 0, 0, 1, 1, 2], [0], [0]>} : vector<2x16x16xf32>, vector<2x16x32xf32>, vector<2x16x32xf32> -> vector<2x16x32xf32>
    "tpu.trace_stop"() : () -> ()
    %18 = vector.shape_cast %17 : vector<2x16x32xf32> to vector<32x32xf32>
    %c0_16 = arith.constant 0 : index
    %c0_17 = arith.constant 0 : index
    %19 = vector.load %arg6[%c0_16, %c0_17] : memref<32x32xf32, #tpu.memory_space<vmem>>, vector<32x32xf32>
    %cst_18 = arith.constant dense<0.000000e+00> : vector<32x32xf32>
    %20 = tpu.matmul %18, %19, %cst_18 {dimension_numbers = #tpu.dot_dimension_numbers<[1], [0], [0], [1], [0, 0, 1, 1], [], []>} : vector<32x32xf32>, vector<32x32xf32>, vector<32x32xf32> -> vector<32x32xf32>
    %21 = arith.addf %5, %20 : vector<32x32xf32>
    %cst_19 = arith.constant 0.000000e+00 : f32
    %22 = vector.broadcast %cst_19 : f32 to vector<32x32xf32>
    %23 = arith.maximumf %21, %22 : vector<32x32xf32>
    %c0_20 = arith.constant 0 : index
    %c0_21 = arith.constant 0 : index
    %24 = vector.load %arg7[%c0_20, %c0_21] : memref<32x32xf32, #tpu.memory_space<vmem>>, vector<32x32xf32>
    %cst_22 = arith.constant dense<0.000000e+00> : vector<32x32xf32>
    %25 = tpu.matmul %23, %24, %cst_22 {dimension_numbers = #tpu.dot_dimension_numbers<[1], [0], [0], [1], [0, 0, 1, 1], [], []>} : vector<32x32xf32>, vector<32x32xf32>, vector<32x32xf32> -> vector<32x32xf32>
    %26 = arith.addf %7, %25 : vector<32x32xf32>
    %cst_23 = arith.constant 0.000000e+00 : f32
    %27 = vector.broadcast %cst_23 : f32 to vector<32x32xf32>
    %28 = arith.maximumf %26, %27 : vector<32x32xf32>
    %c0_24 = arith.constant 0 : index
    %c0_25 = arith.constant 0 : index
    %29 = vector.load %arg3[%c0_24, %c0_25] : memref<2x32xf32, #tpu.memory_space<vmem>>, vector<2x32xf32>
    %cst_26 = arith.constant dense<0.000000e+00> : vector<2x32xf32>
    %30 = tpu.matmul %29, %28, %cst_26 {dimension_numbers = #tpu.dot_dimension_numbers<[1], [0], [0], [1], [0, 0, 1, 1], [], []>} : vector<2x32xf32>, vector<32x32xf32>, vector<2x32xf32> -> vector<2x32xf32>
    %c0_27 = arith.constant 0 : index
    %c0_28 = arith.constant 0 : index
    %31 = vector.load %arg10[%c0_27, %c0_28] : memref<2x128xf32, #tpu.memory_space<vmem>>, vector<2x128xf32>
    %c0_29 = arith.constant 0 : index
    %c0_30 = arith.constant 0 : index
    %32 = vector.load %arg8[%c0_29, %c0_30] : memref<32x128xf32, #tpu.memory_space<vmem>>, vector<32x128xf32>
    %cst_31 = arith.constant dense<0.000000e+00> : vector<2x128xf32>
    %33 = tpu.matmul %30, %32, %cst_31 {dimension_numbers = #tpu.dot_dimension_numbers<[1], [0], [0], [1], [0, 0, 1, 1], [], []>} : vector<2x32xf32>, vector<32x128xf32>, vector<2x128xf32> -> vector<2x128xf32>
    %34 = vector.extract_strided_slice %31 {offsets = [0, 0], sizes = [1, 128], strides = [1, 1]} : vector<2x128xf32> to vector<1x128xf32>
    %35 = vector.broadcast %34 : vector<1x128xf32> to vector<2x128xf32>
    %36 = arith.addf %33, %35 : vector<2x128xf32>
    %cst_32 = arith.constant 0.000000e+00 : f32
    %37 = vector.broadcast %cst_32 : f32 to vector<2x128xf32>
    %38 = arith.maximumf %36, %37 : vector<2x128xf32>
    %c0_33 = arith.constant 0 : index
    %c0_34 = arith.constant 0 : index
    %39 = vector.load %arg9[%c0_33, %c0_34] : memref<128x128xf32, #tpu.memory_space<vmem>>, vector<128x128xf32>
    %cst_35 = arith.constant dense<0.000000e+00> : vector<2x128xf32>
    %40 = tpu.matmul %38, %39, %cst_35 {dimension_numbers = #tpu.dot_dimension_numbers<[1], [0], [0], [1], [0, 0, 1, 1], [], []>} : vector<2x128xf32>, vector<128x128xf32>, vector<2x128xf32> -> vector<2x128xf32>
    %41 = vector.extract_strided_slice %31 {offsets = [1, 0], sizes = [1, 128], strides = [1, 1]} : vector<2x128xf32> to vector<1x128xf32>
    %42 = vector.broadcast %41 : vector<1x128xf32> to vector<2x128xf32>
    %43 = arith.addf %40, %42 : vector<2x128xf32>
    %44 = arith.negf %43 : vector<2x128xf32>
    %45 = math.exp %44 : vector<2x128xf32>
    %cst_36 = arith.constant 1.000000e+00 : f32
    %46 = vector.broadcast %cst_36 : f32 to vector<2x128xf32>
    %47 = arith.addf %46, %45 : vector<2x128xf32>
    %48 = arith.divf %46, %47 : vector<2x128xf32>
    %c0_37 = arith.constant 0 : index
    %c0_38 = arith.constant 0 : index
    %49 = vector.load %arg11[%c0_37, %c0_38] : memref<2x128xf32, #tpu.memory_space<vmem>>, vector<2x128xf32>
    tpu.vector_store %arg11[%c0_37, %c0_38], %48 {strides = array<i32>} : memref<2x128xf32, #tpu.memory_space<vmem>>, vector<2x128xf32>,
    return
  }
  func.func @transform_0(%arg0: i32) -> (i32, i32) {
    %c0_i32 = arith.constant 0 : i32
    %c0_i32_0 = arith.constant 0 : i32
    return %arg0, %c0_i32 : i32, i32
  }
  func.func @transform_1(%arg0: i32) -> (i32, i32, i32) {
    %c0_i32 = arith.constant 0 : i32
    %c0_i32_0 = arith.constant 0 : i32
    %c0_i32_1 = arith.constant 0 : i32
    return %arg0, %c0_i32, %c0_i32_0 : i32, i32, i32
  }
  func.func @transform_2(%arg0: i32) -> (i32, i32) {
    %c0_i32 = arith.constant 0 : i32
    %c0_i32_0 = arith.constant 0 : i32
    %c0_i32_1 = arith.constant 0 : i32
    return %c0_i32, %c0_i32_0 : i32, i32
  }
  func.func @transform_3(%arg0: i32) -> (i32, i32) {
    %c0_i32 = arith.constant 0 : i32
    %c0_i32_0 = arith.constant 0 : i32
    %c0_i32_1 = arith.constant 0 : i32
    return %c0_i32, %c0_i32_0 : i32, i32
  }
  func.func @transform_4(%arg0: i32) -> (i32, i32) {
    %c0_i32 = arith.constant 0 : i32
    %c0_i32_0 = arith.constant 0 : i32
    %c0_i32_1 = arith.constant 0 : i32
    return %c0_i32, %c0_i32_0 : i32, i32
  }
  func.func @transform_5(%arg0: i32) -> (i32, i32) {
    %c0_i32 = arith.constant 0 : i32
    %c0_i32_0 = arith.constant 0 : i32
    %c0_i32_1 = arith.constant 0 : i32
    return %c0_i32, %c0_i32_0 : i32, i32
  }
  func.func @transform_6(%arg0: i32) -> (i32, i32) {
    %c0_i32 = arith.constant 0 : i32
    %c0_i32_0 = arith.constant 0 : i32
    %c0_i32_1 = arith.constant 0 : i32
    return %c0_i32, %c0_i32_0 : i32, i32
  }
  func.func @transform_7(%arg0: i32) -> (i32, i32) {
    %c0_i32 = arith.constant 0 : i32
    %c0_i32_0 = arith.constant 0 : i32
    %c0_i32_1 = arith.constant 0 : i32
    return %c0_i32, %c0_i32_0 : i32, i32
  }
  func.func @transform_8(%arg0: i32) -> (i32, i32) {
    %c0_i32 = arith.constant 0 : i32
    %c0_i32_0 = arith.constant 0 : i32
    %c0_i32_1 = arith.constant 0 : i32
    return %c0_i32, %c0_i32_0 : i32, i32
  }
  func.func @transform_9(%arg0: i32) -> (i32, i32) {
    %c0_i32 = arith.constant 0 : i32
    %c0_i32_0 = arith.constant 0 : i32
    %c0_i32_1 = arith.constant 0 : i32
    return %c0_i32, %c0_i32_0 : i32, i32
  }
  func.func @transform_10(%arg0: i32) -> (i32, i32) {
    %c0_i32 = arith.constant 0 : i32
    %c0_i32_0 = arith.constant 0 : i32
    return %arg0, %c0_i32 : i32, i32
  }
}

</mosaic_0001>

<llo_original>
// kernel: tpu_custom_call.1
$region0: #{tpu_custom_call.1}
  #allocation0 [shape = 'u32[]', space=smem, size = 0x4, offset = 0x4, fixed_abs, tag = 'smem constant byte address 0x4 - core index']
  #allocation1 [shape = 'u32[144,128]{1,0:T(1,128)}', space=vmem, size = 0x12000, scoped, tag = 'internal scratch']
  %s0 = inlined_call_operand.vmem [shape: f32[32,17], index: 0, kind: input, shape index: {}]
  %s1 = inlined_call_operand.vmem [shape: f32[2,16,16], index: 1, kind: input, shape index: {}]
  %s2 = inlined_call_operand.hbm [shape: f32[2,32], index: 2, kind: input, shape index: {}]
  %s3 = inlined_call_operand.hbm [shape: f32[17,32], index: 3, kind: input, shape index: {}]
  %s4 = inlined_call_operand.hbm [shape: f32[17,32], index: 4, kind: input, shape index: {}]
  %s5 = inlined_call_operand.vmem [shape: f32[32,32], index: 5, kind: input, shape index: {}]
  %s6 = inlined_call_operand.hbm [shape: f32[32,32], index: 6, kind: input, shape index: {}]
  %s7 = inlined_call_operand.hbm [shape: f32[32,128], index: 7, kind: input, shape index: {}]
  %s8 = inlined_call_operand.hbm [shape: f32[128,128], index: 8, kind: input, shape index: {}]
  %s9 = inlined_call_operand.vmem [shape: f32[2,128], index: 9, kind: input, shape index: {}]
  %s10 = inlined_call_operand.hbm [shape: f32[2,128], index: 10, kind: output, shape index: {}]
  %s11 = sld [smem:[#allocation0]]
  $region74: #{tpu_custom_call.1} parent=0
    _
  %s13 = ssub.s32 1, %s11
  %s14 = scalar_select 0, %s13, %s11
  $region1: #{tpu_custom_call.1} parent=0
    #allocation2 [shape = 'u8[1024]{0}', space=vmem, size = 0x400, scoped, tag = 'input window, operand 2, single buffered']
    #allocation3 [shape = 's32[1]{0}', space=sflag, size = 0x4, scoped, tag = 'scoped memory for tpu_custom_call.1']
    #allocation4 [shape = 's32[1]{0}', space=sflag, size = 0x4, scoped, tag = 'scoped memory for tpu_custom_call.1']
    #allocation5 [shape = 'u8[12288]{0}', space=vmem, size = 0x3000, scoped, tag = 'input window, operand 3, single buffered']
    #allocation6 [shape = 's32[1]{0}', space=sflag, size = 0x4, scoped, tag = 'scoped memory for tpu_custom_call.1']
    #allocation7 [shape = 'u8[12288]{0}', space=vmem, size = 0x3000, scoped, tag = 'input window, operand 4, single buffered']
    #allocation8 [shape = 'u8[16384]{0}', space=vmem, size = 0x4000, scoped, tag = 'input window, operand 6, single buffered']
    #allocation9 [shape = 's32[1]{0}', space=sflag, size = 0x4, scoped, tag = 'scoped memory for tpu_custom_call.1']
    #allocation10 [shape = 'u8[16384]{0}', space=vmem, size = 0x4000, scoped, tag = 'input window, operand 7, single buffered']
    #allocation11 [shape = 'u8[65536]{0}', space=vmem, size = 0x10000, scoped, tag = 'input window, operand 8, single buffered']
    #allocation12 [shape = 's32[1]{0}', space=sflag, size = 0x4, scoped, tag = 'scoped memory for tpu_custom_call.1']
    #allocation13 [shape = 'u8[1024]{0}', space=vmem, size = 0x400, scoped, tag = 'output window, operand 0, single buffered']
    %15 = vsyncpa [#allocation3], 0
    %16 = vsyncpa [#allocation6], 0
    %17 = vsyncpa [#allocation9], 0
    %18 = vsyncpa [#allocation12], 0
    %19 = vsyncpa [#allocation4], 0
    // Predicated region
    $region2: #{tpu_custom_call.1} parent=1 // pred_check
      _
    $region3: #{tpu_custom_call.1} parent=1 // pred_check_branch
      %21 = sbr.rel (0) target = $region5
    $region4: #{tpu_custom_call.1} parent=1 // pred_region
      _
    $region5: #{tpu_custom_call.1} parent=1 // pred_fallthru
      _
    // Predicated region
    $region6: #{tpu_custom_call.1} parent=1 // pred_check
      _
    $region7: #{tpu_custom_call.1} parent=1 // pred_check_branch
      %23 = sbr.rel (0) target = $region9
    $region8: #{tpu_custom_call.1} parent=1 // pred_region
      _
    $region9: #{tpu_custom_call.1} parent=1 // pred_fallthru
      _
    // Predicated region
    $region10: #{tpu_custom_call.1} parent=1 // pred_check
      _
    $region11: #{tpu_custom_call.1} parent=1 // pred_check_branch
      %25 = sbr.rel (0) target = $region13
    $region12: #{tpu_custom_call.1} parent=1 // pred_region
      %s27 = ssub.s32 32, 32
      %28 = vsyncadd [#allocation3], %s27
      %s30 = sshll.u32 [#allocation2], 4
      %s31 = int_to_ptr.vmem [resolvable:$true] %s30
      %33 = dma.hbm_to_vmem [thread:$0]  %s2, 32, %s31, [#allocation3]
    $region13: #{tpu_custom_call.1} parent=1 // pred_fallthru
      _
    // Predicated region
    $region14: #{tpu_custom_call.1} parent=1 // pred_check
      _
    $region15: #{tpu_custom_call.1} parent=1 // pred_check_branch
      %35 = sbr.rel (0) target = $region17
    $region16: #{tpu_custom_call.1} parent=1 // pred_region
      %s37 = ssub.s32 384, 384
      %38 = vsyncadd [#allocation6], %s37
      %s39 = sshll.u32 [#allocation5], 4
      %s40 = int_to_ptr.vmem [resolvable:$true] %s39
      %45 = dma.hbm_to_vmem [thread:$0]  %s3, 384, %s40, [#allocation6], 128, 128, 8
    $region17: #{tpu_custom_call.1} parent=1 // pred_fallthru
      _
    // Predicated region
    $region18: #{tpu_custom_call.1} parent=1 // pred_check
      _
    $region19: #{tpu_custom_call.1} parent=1 // pred_check_branch
      %47 = sbr.rel (0) target = $region21
    $region20: #{tpu_custom_call.1} parent=1 // pred_region
      %s49 = ssub.s32 384, 384
      %50 = vsyncadd [#allocation6], %s49
      %s51 = sshll.u32 [#allocation7], 4
      %s52 = int_to_ptr.vmem [resolvable:$true] %s51
      %57 = dma.hbm_to_vmem [thread:$0]  %s4, 384, %s52, [#allocation6], 128, 128, 8
    $region21: #{tpu_custom_call.1} parent=1 // pred_fallthru
      _
    // Predicated region
    $region22: #{tpu_custom_call.1} parent=1 // pred_check
      _
    $region23: #{tpu_custom_call.1} parent=1 // pred_check_branch
      %59 = sbr.rel (0) target = $region25
    $region24: #{tpu_custom_call.1} parent=1 // pred_region
      _
    $region25: #{tpu_custom_call.1} parent=1 // pred_fallthru
      _
    // Predicated region
    $region26: #{tpu_custom_call.1} parent=1 // pred_check
      _
    $region27: #{tpu_custom_call.1} parent=1 // pred_check_branch
      %61 = sbr.rel (0) target = $region29
    $region28: #{tpu_custom_call.1} parent=1 // pred_region
      %s63 = ssub.s32 512, 512
      %64 = vsyncadd [#allocation9], %s63
      %s65 = sshll.u32 [#allocation8], 4
      %s66 = int_to_ptr.vmem [resolvable:$true] %s65
      %71 = dma.hbm_to_vmem [thread:$0]  %s6, 512, %s66, [#allocation9], 128, 128, 8
    $region29: #{tpu_custom_call.1} parent=1 // pred_fallthru
      _
    // Predicated region
    $region30: #{tpu_custom_call.1} parent=1 // pred_check
      _
    $region31: #{tpu_custom_call.1} parent=1 // pred_check_branch
      %73 = sbr.rel (0) target = $region33
    $region32: #{tpu_custom_call.1} parent=1 // pred_region
      %s75 = ssub.s32 512, 512
      %76 = vsyncadd [#allocation9], %s75
      %s77 = sshll.u32 [#allocation10], 4
      %s78 = int_to_ptr.vmem [resolvable:$true] %s77
      %83 = dma.hbm_to_vmem [thread:$0]  %s7, 512, %s78, [#allocation9], 128, 128, 8
    $region33: #{tpu_custom_call.1} parent=1 // pred_fallthru
      _
    // Predicated region
    $region34: #{tpu_custom_call.1} parent=1 // pred_check
      _
    $region35: #{tpu_custom_call.1} parent=1 // pred_check_branch
      %85 = sbr.rel (0) target = $region37
    $region36: #{tpu_custom_call.1} parent=1 // pred_region
      %s87 = ssub.s32 2048, 2048
      %88 = vsyncadd [#allocation12], %s87
      %s89 = sshll.u32 [#allocation11], 4
      %s90 = int_to_ptr.vmem [resolvable:$true] %s89
      %95 = dma.hbm_to_vmem [thread:$0]  %s8, 2048, %s90, [#allocation12], 128, 128, 8
    $region37: #{tpu_custom_call.1} parent=1 // pred_fallthru
      _
    // Predicated region
    $region38: #{tpu_custom_call.1} parent=1 // pred_check
      _
    $region39: #{tpu_custom_call.1} parent=1 // pred_check_branch
      %97 = sbr.rel (0) target = $region41
    $region40: #{tpu_custom_call.1} parent=1 // pred_region
      _
    $region41: #{tpu_custom_call.1} parent=1 // pred_fallthru
      _
    // Predicated region
    $region42: #{tpu_custom_call.1} parent=1 // pred_check
      _
    $region43: #{tpu_custom_call.1} parent=1 // pred_check_branch
      %99 = sbr.rel (0) target = $region45
    $region44: #{tpu_custom_call.1} parent=1 // pred_region
      %100 = dma.done [#allocation3], 32
    $region45: #{tpu_custom_call.1} parent=1 // pred_fallthru
      _
    // Predicated region
    $region46: #{tpu_custom_call.1} parent=1 // pred_check
      _
    $region47: #{tpu_custom_call.1} parent=1 // pred_check_branch
      %102 = sbr.rel (0) target = $region49
    $region48: #{tpu_custom_call.1} parent=1 // pred_region
      %103 = dma.done [#allocation6], 384
    $region49: #{tpu_custom_call.1} parent=1 // pred_fallthru
      _
    // Predicated region
    $region50: #{tpu_custom_call.1} parent=1 // pred_check
      _
    $region51: #{tpu_custom_call.1} parent=1 // pred_check_branch
      %105 = sbr.rel (0) target = $region53
    $region52: #{tpu_custom_call.1} parent=1 // pred_region
      %106 = dma.done [#allocation6], 384
    $region53: #{tpu_custom_call.1} parent=1 // pred_fallthru
      _
    // Predicated region
    $region54: #{tpu_custom_call.1} parent=1 // pred_check
      _
    $region55: #{tpu_custom_call.1} parent=1 // pred_check_branch
      %108 = sbr.rel (0) target = $region57
    $region56: #{tpu_custom_call.1} parent=1 // pred_region
      %109 = dma.done [#allocation9], 512
    $region57: #{tpu_custom_call.1} parent=1 // pred_fallthru
      _
    // Predicated region
    $region58: #{tpu_custom_call.1} parent=1 // pred_check
      _
    $region59: #{tpu_custom_call.1} parent=1 // pred_check_branch
      %111 = sbr.rel (0) target = $region61
    $region60: #{tpu_custom_call.1} parent=1 // pred_region
      %112 = dma.done [#allocation9], 512
    $region61: #{tpu_custom_call.1} parent=1 // pred_fallthru
      _
    // Predicated region
    $region62: #{tpu_custom_call.1} parent=1 // pred_check
      _
    $region63: #{tpu_custom_call.1} parent=1 // pred_check_branch
      %114 = sbr.rel (0) target = $region65
    $region64: #{tpu_custom_call.1} parent=1 // pred_region
      %115 = dma.done [#allocation12], 2048
    $region65: #{tpu_custom_call.1} parent=1 // pred_fallthru
      _
    %v116 = vld [vmem:[%s0] sm:$0xff]
    %v117 = vld [vmem:[%s0 + $0x8] sm:$0xff]
    %v118 = vld [vmem:[%s0 + $0x10] sm:$0xff]
    %v119 = vld [vmem:[%s0 + $0x18] sm:$0xff]
    %v120 = vld [vmem:[%s1] sm:$0xff]
    %v121 = vld [vmem:[%s1 + $0x8] sm:$0xff]
    %v122 = vld [vmem:[%s1 + $0x10] sm:$0xff]
    %v123 = vld [vmem:[%s1 + $0x18] sm:$0xff]
    %v124 = vld [vmem:[#allocation5] sm:$0xff]
    %v125 = vld [vmem:[#allocation5 + $0x8] sm:$0xff]
    %v126 = vld [vmem:[#allocation5 + $0x10] sm:$0x1]
    %vm127 = vcmask 138240
    %v129 = vsel %vm127, %v116, 0
    %v132 = vsel %vm127, %v117, 0
    %v135 = vsel %vm127, %v118, 0
    %v138 = vsel %vm127, %v119, 0
    %vm140 = vcmask 1040384
    %v142 = vsel %vm140, %v126, 0
    %144 = vmatprep.subr.mxu0 0.0
    %145 = vmatpush1.msra.mxu0 0.0
    %146 = vmatprep.subr.mxu0 0.0
    %147 = vmatpush1.msra.mxu0 0.0
    %148 = vmatprep.subr.mxu0 0.0
    %149 = vmatpush1.msra.mxu0 0.0
    %150 = vmatprep.subr.mxu0 0.0
    %151 = vmatpush1.msra.mxu0 0.0
    %152 = vmatprep.subr.mxu0 0.0
    %153 = vmatpush1.msra.mxu0 0.0
    %154 = vmatprep.subr.mxu0 0.0
    %155 = vmatpush1.msra.mxu0 0.0
    %156 = vmatprep.subr.mxu0 0.0
    %157 = vmatpush1.msra.mxu0 0.0
    %158 = vmatprep.subr.mxu0 0.0
    %159 = vmatpush1.msra.mxu0 0.0
    %160 = vmatprep.subr.mxu0 0.0
    %161 = vmatpush1.msra.mxu0 0.0
    %162 = vmatprep.subr.mxu0 0.0
    %163 = vmatpush1.msra.mxu0 0.0
    %164 = vmatprep.subr.mxu0 0.0
    %165 = vmatpush1.msra.mxu0 0.0
    %166 = vmatprep.subr.mxu0 0.0
    %167 = vmatpush1.msra.mxu0 0.0
    %168 = vmatprep.subr.mxu0 0.0
    %169 = vmatpush1.msra.mxu0 0.0
    %170 = vmatprep.subr.mxu0 0.0
    %171 = vmatpush1.msra.mxu0 %v142
    %172 = vmatprep.subr.mxu0 0.0
    %173 = vmatpush1.msra.mxu0 %v125
    %174 = vmatprep.subr.mxu0 0.0
    %175 = vmatpush1.msra.mxu0 %v124
    %176 = vmatprep.subr.mxu0 0.0
    %177 = vmatpush2.msra.mxu0 0.0
    %178 = vmatprep.subr.mxu0 0.0
    %179 = vmatpush2.msra.mxu0 0.0
    %180 = vmatprep.subr.mxu0 0.0
    %181 = vmatpush2.msra.mxu0 0.0
    %182 = vmatprep.subr.mxu0 0.0
    %183 = vmatpush2.msra.mxu0 0.0
    %184 = vmatprep.subr.mxu0 0.0
    %185 = vmatpush2.msra.mxu0 0.0
    %186 = vmatprep.subr.mxu0 0.0
    %187 = vmatpush2.msra.mxu0 0.0
    %188 = vmatprep.subr.mxu0 0.0
    %189 = vmatpush2.msra.mxu0 0.0
    %190 = vmatprep.subr.mxu0 0.0
    %191 = vmatpush2.msra.mxu0 0.0
    %192 = vmatprep.subr.mxu0 0.0
    %193 = vmatpush2.msra.mxu0 0.0
    %194 = vmatprep.subr.mxu0 0.0
    %195 = vmatpush2.msra.mxu0 0.0
    %196 = vmatprep.subr.mxu0 0.0
    %197 = vmatpush2.msra.mxu0 0.0
    %198 = vmatprep.subr.mxu0 0.0
    %199 = vmatpush2.msra.mxu0 0.0
    %200 = vmatprep.subr.mxu0 0.0
    %201 = vmatpush2.msra.mxu0 0.0
    %202 = vmatprep.subr.mxu0 0.0
    %203 = vmatpush2.msra.mxu0 0.0
    %204 = vmatprep.subr.mxu0 0.0
    %205 = vmatpush2.msra.mxu0 0.0
    %206 = vmatprep.subr.mxu0 0.0
    %207 = vmatpush2.msra.mxu0 0.0
    %208 = vmatprep.mubr.f32.mxu0 0.0
    %209 = vmatmul.mubr.f32.gmra.mxu0 %v129
    %v210 = vpop.f32.mrf.mxu0
    %v211 = vadd.f32 0.0, %v210
    %v212 = vpop.f32.mrf.mxu0
    %213 = vmatprep.mubr.f32.mxu0 0.0
    %214 = vmatmul.mubr.f32.gmra.mxu0 %v132
    %v215 = vpop.f32.mrf.mxu0
    %v216 = vadd.f32 0.0, %v215
    %v217 = vpop.f32.mrf.mxu0
    %218 = vmatprep.mubr.f32.mxu0 0.0
    %219 = vmatmul.mubr.f32.gmra.mxu0 %v135
    %v220 = vpop.f32.mrf.mxu0
    %v221 = vadd.f32 0.0, %v220
    %v222 = vpop.f32.mrf.mxu0
    %223 = vmatprep.mubr.f32.mxu0 0.0
    %224 = vmatmul.mubr.f32.gmra.mxu0 %v138
    %v225 = vpop.f32.mrf.mxu0
    %v226 = vadd.f32 0.0, %v225
    %v227 = vpop.f32.mrf.mxu0
    %228 = vdwg.mxu0
    %v229 = vmax.f32 %v211, 0.0
    %v230 = vmax.f32 %v216, 0.0
    %v231 = vmax.f32 %v221, 0.0
    %v232 = vmax.f32 %v226, 0.0
    %v233 = vld [vmem:[#allocation7] sm:$0xff]
    %v234 = vld [vmem:[#allocation7 + $0x8] sm:$0xff]
    %v235 = vld [vmem:[#allocation7 + $0x10] sm:$0x1]
    %vm236 = vcmask 130048
    %v238 = vsel %vm236, %v120, 0
    %v241 = vsel %vm236, %v121, 0
    %243 = vmatprep.subr.mxu0 0.0
    %244 = vmatpush1.msra.mxu0 0.0
    %245 = vmatprep.subr.mxu0 0.0
    %246 = vmatpush1.msra.mxu0 0.0
    %247 = vmatprep.subr.mxu0 0.0
    %248 = vmatpush1.msra.mxu0 0.0
    %249 = vmatprep.subr.mxu0 0.0
    %250 = vmatpush1.msra.mxu0 0.0
    %251 = vmatprep.subr.mxu0 0.0
    %252 = vmatpush1.msra.mxu0 0.0
    %253 = vmatprep.subr.mxu0 0.0
    %254 = vmatpush1.msra.mxu0 0.0
    %255 = vmatprep.subr.mxu0 0.0
    %256 = vmatpush1.msra.mxu0 0.0
    %257 = vmatprep.subr.mxu0 0.0
    %258 = vmatpush1.msra.mxu0 0.0
    %259 = vmatprep.subr.mxu0 0.0
    %260 = vmatpush1.msra.mxu0 0.0
    %261 = vmatprep.subr.mxu0 0.0
    %262 = vmatpush1.msra.mxu0 0.0
    %263 = vmatprep.subr.mxu0 0.0
    %264 = vmatpush1.msra.mxu0 0.0
    %265 = vmatprep.subr.mxu0 0.0
    %266 = vmatpush1.msra.mxu0 0.0
    %267 = vmatprep.subr.mxu0 0.0
    %268 = vmatpush1.msra.mxu0 0.0
    %269 = vmatprep.subr.mxu0 0.0
    %270 = vmatpush1.msra.mxu0 0.0
    %271 = vmatprep.subr.mxu0 0.0
    %272 = vmatpush1.msra.mxu0 %v230
    %273 = vmatprep.subr.mxu0 0.0
    %274 = vmatpush1.msra.mxu0 %v229
    %275 = vmatprep.subr.mxu0 0.0
    %276 = vmatpush2.msra.mxu0 0.0
    %277 = vmatprep.subr.mxu0 0.0
    %278 = vmatpush2.msra.mxu0 0.0
    %279 = vmatprep.subr.mxu0 0.0
    %280 = vmatpush2.msra.mxu0 0.0
    %281 = vmatprep.subr.mxu0 0.0
    %282 = vmatpush2.msra.mxu0 0.0
    %283 = vmatprep.subr.mxu0 0.0
    %284 = vmatpush2.msra.mxu0 0.0
    %285 = vmatprep.subr.mxu0 0.0
    %286 = vmatpush2.msra.mxu0 0.0
    %287 = vmatprep.subr.mxu0 0.0
    %288 = vmatpush2.msra.mxu0 0.0
    %289 = vmatprep.subr.mxu0 0.0
    %290 = vmatpush2.msra.mxu0 0.0
    %291 = vmatprep.subr.mxu0 0.0
    %292 = vmatpush2.msra.mxu0 0.0
    %293 = vmatprep.subr.mxu0 0.0
    %294 = vmatpush2.msra.mxu0 0.0
    %295 = vmatprep.subr.mxu0 0.0
    %296 = vmatpush2.msra.mxu0 0.0
    %297 = vmatprep.subr.mxu0 0.0
    %298 = vmatpush2.msra.mxu0 0.0
    %299 = vmatprep.subr.mxu0 0.0
    %300 = vmatpush2.msra.mxu0 0.0
    %301 = vmatprep.subr.mxu0 0.0
    %302 = vmatpush2.msra.mxu0 0.0
    %303 = vmatprep.subr.mxu0 0.0
    %304 = vmatpush2.msra.mxu0 0.0
    %305 = vmatprep.subr.mxu0 0.0
    %306 = vmatpush2.msra.mxu0 0.0
    %307 = vmatprep.mubr.f32.mxu0 0.0
    %308 = vmatmul.mubr.f32.gmra.mxu0 %v238
    %v309 = vpop.f32.mrf.mxu0
    %v310 = vadd.f32 0.0, %v309
    %v311 = vpop.f32.mrf.mxu0
    %312 = vmatprep.mubr.f32.mxu0 0.0
    %313 = vmatmul.mubr.f32.gmra.mxu0 %v241
    %v314 = vpop.f32.mrf.mxu0
    %v315 = vadd.f32 0.0, %v314
    %v316 = vpop.f32.mrf.mxu0
    %317 = vdwg.mxu0
    %v319 = vsel %vm236, %v122, 0
    %v322 = vsel %vm236, %v123, 0
    %324 = vmatprep.subr.mxu0 0.0
    %325 = vmatpush1.msra.mxu0 0.0
    %326 = vmatprep.subr.mxu0 0.0
    %327 = vmatpush1.msra.mxu0 0.0
    %328 = vmatprep.subr.mxu0 0.0
    %329 = vmatpush1.msra.mxu0 0.0
    %330 = vmatprep.subr.mxu0 0.0
    %331 = vmatpush1.msra.mxu0 0.0
    %332 = vmatprep.subr.mxu0 0.0
    %333 = vmatpush1.msra.mxu0 0.0
    %334 = vmatprep.subr.mxu0 0.0
    %335 = vmatpush1.msra.mxu0 0.0
    %336 = vmatprep.subr.mxu0 0.0
    %337 = vmatpush1.msra.mxu0 0.0
    %338 = vmatprep.subr.mxu0 0.0
    %339 = vmatpush1.msra.mxu0 0.0
    %340 = vmatprep.subr.mxu0 0.0
    %341 = vmatpush1.msra.mxu0 0.0
    %342 = vmatprep.subr.mxu0 0.0
    %343 = vmatpush1.msra.mxu0 0.0
    %344 = vmatprep.subr.mxu0 0.0
    %345 = vmatpush1.msra.mxu0 0.0
    %346 = vmatprep.subr.mxu0 0.0
    %347 = vmatpush1.msra.mxu0 0.0
    %348 = vmatprep.subr.mxu0 0.0
    %349 = vmatpush1.msra.mxu0 0.0
    %350 = vmatprep.subr.mxu0 0.0
    %351 = vmatpush1.msra.mxu0 0.0
    %352 = vmatprep.subr.mxu0 0.0
    %353 = vmatpush1.msra.mxu0 %v232
    %354 = vmatprep.subr.mxu0 0.0
    %355 = vmatpush1.msra.mxu0 %v231
    %356 = vmatprep.subr.mxu0 0.0
    %357 = vmatpush2.msra.mxu0 0.0
    %358 = vmatprep.subr.mxu0 0.0
    %359 = vmatpush2.msra.mxu0 0.0
    %360 = vmatprep.subr.mxu0 0.0
    %361 = vmatpush2.msra.mxu0 0.0
    %362 = vmatprep.subr.mxu0 0.0
    %363 = vmatpush2.msra.mxu0 0.0
    %364 = vmatprep.subr.mxu0 0.0
    %365 = vmatpush2.msra.mxu0 0.0
    %366 = vmatprep.subr.mxu0 0.0
    %367 = vmatpush2.msra.mxu0 0.0
    %368 = vmatprep.subr.mxu0 0.0
    %369 = vmatpush2.msra.mxu0 0.0
    %370 = vmatprep.subr.mxu0 0.0
    %371 = vmatpush2.msra.mxu0 0.0
    %372 = vmatprep.subr.mxu0 0.0
    %373 = vmatpush2.msra.mxu0 0.0
    %374 = vmatprep.subr.mxu0 0.0
    %375 = vmatpush2.msra.mxu0 0.0
    %376 = vmatprep.subr.mxu0 0.0
    %377 = vmatpush2.msra.mxu0 0.0
    %378 = vmatprep.subr.mxu0 0.0
    %379 = vmatpush2.msra.mxu0 0.0
    %380 = vmatprep.subr.mxu0 0.0
    %381 = vmatpush2.msra.mxu0 0.0
    %382 = vmatprep.subr.mxu0 0.0
    %383 = vmatpush2.msra.mxu0 0.0
    %384 = vmatprep.subr.mxu0 0.0
    %385 = vmatpush2.msra.mxu0 0.0
    %386 = vmatprep.subr.mxu0 0.0
    %387 = vmatpush2.msra.mxu0 0.0
    %388 = vmatprep.mubr.f32.mxu0 0.0
    %389 = vmatmul.mubr.f32.gmra.mxu0 %v319
    %v390 = vpop.f32.mrf.mxu0
    %v391 = vadd.f32 0.0, %v390
    %v392 = vpop.f32.mrf.mxu0
    %393 = vmatprep.mubr.f32.mxu0 0.0
    %394 = vmatmul.mubr.f32.gmra.mxu0 %v322
    %v395 = vpop.f32.mrf.mxu0
    %v396 = vadd.f32 0.0, %v395
    %v397 = vpop.f32.mrf.mxu0
    %398 = vdwg.mxu0
    %v399 = vld [vmem:[%s5] sm:$0xff]
    %v400 = vld [vmem:[%s5 + $0x8] sm:$0xff]
    %v401 = vld [vmem:[%s5 + $0x10] sm:$0xff]
    %v402 = vld [vmem:[%s5 + $0x18] sm:$0xff]
    %vm403 = vcmask 261120
    %v405 = vsel %vm403, %v310, 0
    %v408 = vsel %vm403, %v315, 0
    %v411 = vsel %vm403, %v391, 0
    %v414 = vsel %vm403, %v396, 0
    %416 = vmatprep.subr.mxu0 0.0
    %417 = vmatpush1.msra.mxu0 0.0
    %418 = vmatprep.subr.mxu0 0.0
    %419 = vmatpush1.msra.mxu0 0.0
    %420 = vmatprep.subr.mxu0 0.0
    %421 = vmatpush1.msra.mxu0 0.0
    %422 = vmatprep.subr.mxu0 0.0
    %423 = vmatpush1.msra.mxu0 0.0
    %424 = vmatprep.subr.mxu0 0.0
    %425 = vmatpush1.msra.mxu0 0.0
    %426 = vmatprep.subr.mxu0 0.0
    %427 = vmatpush1.msra.mxu0 0.0
    %428 = vmatprep.subr.mxu0 0.0
    %429 = vmatpush1.msra.mxu0 0.0
    %430 = vmatprep.subr.mxu0 0.0
    %431 = vmatpush1.msra.mxu0 0.0
    %432 = vmatprep.subr.mxu0 0.0
    %433 = vmatpush1.msra.mxu0 0.0
    %434 = vmatprep.subr.mxu0 0.0
    %435 = vmatpush1.msra.mxu0 0.0
    %436 = vmatprep.subr.mxu0 0.0
    %437 = vmatpush1.msra.mxu0 0.0
    %438 = vmatprep.subr.mxu0 0.0
    %439 = vmatpush1.msra.mxu0 0.0
    %440 = vmatprep.subr.mxu0 0.0
    %441 = vmatpush1.msra.mxu0 %v402
    %442 = vmatprep.subr.mxu0 0.0
    %443 = vmatpush1.msra.mxu0 %v401
    %444 = vmatprep.subr.mxu0 0.0
    %445 = vmatpush1.msra.mxu0 %v400
    %446 = vmatprep.subr.mxu0 0.0
    %447 = vmatpush1.msra.mxu0 %v399
    %448 = vmatprep.subr.mxu0 0.0
    %449 = vmatpush2.msra.mxu0 0.0
    %450 = vmatprep.subr.mxu0 0.0
    %451 = vmatpush2.msra.mxu0 0.0
    %452 = vmatprep.subr.mxu0 0.0
    %453 = vmatpush2.msra.mxu0 0.0
    %454 = vmatprep.subr.mxu0 0.0
    %455 = vmatpush2.msra.mxu0 0.0
    %456 = vmatprep.subr.mxu0 0.0
    %457 = vmatpush2.msra.mxu0 0.0
    %458 = vmatprep.subr.mxu0 0.0
    %459 = vmatpush2.msra.mxu0 0.0
    %460 = vmatprep.subr.mxu0 0.0
    %461 = vmatpush2.msra.mxu0 0.0
    %462 = vmatprep.subr.mxu0 0.0
    %463 = vmatpush2.msra.mxu0 0.0
    %464 = vmatprep.subr.mxu0 0.0
    %465 = vmatpush2.msra.mxu0 0.0
    %466 = vmatprep.subr.mxu0 0.0
    %467 = vmatpush2.msra.mxu0 0.0
    %468 = vmatprep.subr.mxu0 0.0
    %469 = vmatpush2.msra.mxu0 0.0
    %470 = vmatprep.subr.mxu0 0.0
    %471 = vmatpush2.msra.mxu0 0.0
    %472 = vmatprep.subr.mxu0 0.0
    %473 = vmatpush2.msra.mxu0 0.0
    %474 = vmatprep.subr.mxu0 0.0
    %475 = vmatpush2.msra.mxu0 0.0
    %476 = vmatprep.subr.mxu0 0.0
    %477 = vmatpush2.msra.mxu0 0.0
    %478 = vmatprep.subr.mxu0 0.0
    %479 = vmatpush2.msra.mxu0 0.0
    %480 = vmatprep.mubr.f32.mxu0 0.0
    %481 = vmatmul.mubr.f32.gmra.mxu0 %v405
    %v482 = vpop.f32.mrf.mxu0
    %v483 = vadd.f32 0.0, %v482
    %v484 = vpop.f32.mrf.mxu0
    %485 = vmatprep.mubr.f32.mxu0 0.0
    %486 = vmatmul.mubr.f32.gmra.mxu0 %v408
    %v487 = vpop.f32.mrf.mxu0
    %v488 = vadd.f32 0.0, %v487
    %v489 = vpop.f32.mrf.mxu0
    %490 = vmatprep.mubr.f32.mxu0 0.0
    %491 = vmatmul.mubr.f32.gmra.mxu0 %v411
    %v492 = vpop.f32.mrf.mxu0
    %v493 = vadd.f32 0.0, %v492
    %v494 = vpop.f32.mrf.mxu0
    %495 = vmatprep.mubr.f32.mxu0 0.0
    %496 = vmatmul.mubr.f32.gmra.mxu0 %v414
    %v497 = vpop.f32.mrf.mxu0
    %v498 = vadd.f32 0.0, %v497
    %v499 = vpop.f32.mrf.mxu0
    %500 = vdwg.mxu0
    %v501 = vadd.f32 %v229, %v483
    %v502 = vadd.f32 %v230, %v488
    %v503 = vadd.f32 %v231, %v493
    %v504 = vadd.f32 %v232, %v498
    %v505 = vmax.f32 %v501, 0.0
    %v506 = vmax.f32 %v502, 0.0
    %v507 = vmax.f32 %v503, 0.0
    %v508 = vmax.f32 %v504, 0.0
    %509 = vmatprep.subr.mxu0 0.0
    %510 = vmatpush1.msra.mxu0 0.0
    %511 = vmatprep.subr.mxu0 0.0
    %512 = vmatpush1.msra.mxu0 0.0
    %513 = vmatprep.subr.mxu0 0.0
    %514 = vmatpush1.msra.mxu0 0.0
    %515 = vmatprep.subr.mxu0 0.0
    %516 = vmatpush1.msra.mxu0 0.0
    %517 = vmatprep.subr.mxu0 0.0
    %518 = vmatpush1.msra.mxu0 0.0
    %519 = vmatprep.subr.mxu0 0.0
    %520 = vmatpush1.msra.mxu0 0.0
    %521 = vmatprep.subr.mxu0 0.0
    %522 = vmatpush1.msra.mxu0 0.0
    %523 = vmatprep.subr.mxu0 0.0
    %524 = vmatpush1.msra.mxu0 0.0
    %525 = vmatprep.subr.mxu0 0.0
    %526 = vmatpush1.msra.mxu0 0.0
    %527 = vmatprep.subr.mxu0 0.0
    %528 = vmatpush1.msra.mxu0 0.0
    %529 = vmatprep.subr.mxu0 0.0
    %530 = vmatpush1.msra.mxu0 0.0
    %531 = vmatprep.subr.mxu0 0.0
    %532 = vmatpush1.msra.mxu0 0.0
    %533 = vmatprep.subr.mxu0 0.0
    %534 = vmatpush1.msra.mxu0 0.0
    %535 = vmatprep.subr.mxu0 0.0
    %536 = vmatpush1.msra.mxu0 0.0
    %537 = vmatprep.subr.mxu0 0.0
    %538 = vmatpush1.msra.mxu0 %v506
    %539 = vmatprep.subr.mxu0 0.0
    %540 = vmatpush1.msra.mxu0 %v505
    %541 = vmatprep.subr.mxu0 0.0
    %542 = vmatpush2.msra.mxu0 0.0
    %543 = vmatprep.subr.mxu0 0.0
    %544 = vmatpush2.msra.mxu0 0.0
    %545 = vmatprep.subr.mxu0 0.0
    %546 = vmatpush2.msra.mxu0 0.0
    %547 = vmatprep.subr.mxu0 0.0
    %548 = vmatpush2.msra.mxu0 0.0
    %549 = vmatprep.subr.mxu0 0.0
    %550 = vmatpush2.msra.mxu0 0.0
    %551 = vmatprep.subr.mxu0 0.0
    %552 = vmatpush2.msra.mxu0 0.0
    %553 = vmatprep.subr.mxu0 0.0
    %554 = vmatpush2.msra.mxu0 0.0
    %555 = vmatprep.subr.mxu0 0.0
    %556 = vmatpush2.msra.mxu0 0.0
    %557 = vmatprep.subr.mxu0 0.0
    %558 = vmatpush2.msra.mxu0 0.0
    %559 = vmatprep.subr.mxu0 0.0
    %560 = vmatpush2.msra.mxu0 0.0
    %561 = vmatprep.subr.mxu0 0.0
    %562 = vmatpush2.msra.mxu0 0.0
    %563 = vmatprep.subr.mxu0 0.0
    %564 = vmatpush2.msra.mxu0 0.0
    %565 = vmatprep.subr.mxu0 0.0
    %566 = vmatpush2.msra.mxu0 0.0
    %567 = vmatprep.subr.mxu0 0.0
    %568 = vmatpush2.msra.mxu0 0.0
    %569 = vmatprep.subr.mxu0 0.0
    %570 = vmatpush2.msra.mxu0 0.0
    %571 = vmatprep.subr.mxu0 0.0
    %572 = vmatpush2.msra.mxu0 0.0
    %573 = vmatprep.mubr.f32.mxu0 0.0
    %574 = vmatmul.mubr.f32.gmra.mxu0 %v238
    %v575 = vpop.f32.mrf.mxu0
    %v576 = vadd.f32 0.0, %v575
    %v577 = vpop.f32.mrf.mxu0
    %578 = vmatprep.mubr.f32.mxu0 0.0
    %579 = vmatmul.mubr.f32.gmra.mxu0 %v241
    %v580 = vpop.f32.mrf.mxu0
    %v581 = vadd.f32 0.0, %v580
    %v582 = vpop.f32.mrf.mxu0
    %583 = vdwg.mxu0
    %584 = vmatprep.subr.mxu0 0.0
    %585 = vmatpush1.msra.mxu0 0.0
    %586 = vmatprep.subr.mxu0 0.0
    %587 = vmatpush1.msra.mxu0 0.0
    %588 = vmatprep.subr.mxu0 0.0
    %589 = vmatpush1.msra.mxu0 0.0
    %590 = vmatprep.subr.mxu0 0.0
    %591 = vmatpush1.msra.mxu0 0.0
    %592 = vmatprep.subr.mxu0 0.0
    %593 = vmatpush1.msra.mxu0 0.0
    %594 = vmatprep.subr.mxu0 0.0
    %595 = vmatpush1.msra.mxu0 0.0
    %596 = vmatprep.subr.mxu0 0.0
    %597 = vmatpush1.msra.mxu0 0.0
    %598 = vmatprep.subr.mxu0 0.0
    %599 = vmatpush1.msra.mxu0 0.0
    %600 = vmatprep.subr.mxu0 0.0
    %601 = vmatpush1.msra.mxu0 0.0
    %602 = vmatprep.subr.mxu0 0.0
    %603 = vmatpush1.msra.mxu0 0.0
    %604 = vmatprep.subr.mxu0 0.0
    %605 = vmatpush1.msra.mxu0 0.0
    %606 = vmatprep.subr.mxu0 0.0
    %607 = vmatpush1.msra.mxu0 0.0
    %608 = vmatprep.subr.mxu0 0.0
    %609 = vmatpush1.msra.mxu0 0.0
    %610 = vmatprep.subr.mxu0 0.0
    %611 = vmatpush1.msra.mxu0 0.0
    %612 = vmatprep.subr.mxu0 0.0
    %613 = vmatpush1.msra.mxu0 %v508
    %614 = vmatprep.subr.mxu0 0.0
    %615 = vmatpush1.msra.mxu0 %v507
    %616 = vmatprep.subr.mxu0 0.0
    %617 = vmatpush2.msra.mxu0 0.0
    %618 = vmatprep.subr.mxu0 0.0
    %619 = vmatpush2.msra.mxu0 0.0
    %620 = vmatprep.subr.mxu0 0.0
    %621 = vmatpush2.msra.mxu0 0.0
    %622 = vmatprep.subr.mxu0 0.0
    %623 = vmatpush2.msra.mxu0 0.0
    %624 = vmatprep.subr.mxu0 0.0
    %625 = vmatpush2.msra.mxu0 0.0
    %626 = vmatprep.subr.mxu0 0.0
    %627 = vmatpush2.msra.mxu0 0.0
    %628 = vmatprep.subr.mxu0 0.0
    %629 = vmatpush2.msra.mxu0 0.0
    %630 = vmatprep.subr.mxu0 0.0
    %631 = vmatpush2.msra.mxu0 0.0
    %632 = vmatprep.subr.mxu0 0.0
    %633 = vmatpush2.msra.mxu0 0.0
    %634 = vmatprep.subr.mxu0 0.0
    %635 = vmatpush2.msra.mxu0 0.0
    %636 = vmatprep.subr.mxu0 0.0
    %637 = vmatpush2.msra.mxu0 0.0
    %638 = vmatprep.subr.mxu0 0.0
    %639 = vmatpush2.msra.mxu0 0.0
    %640 = vmatprep.subr.mxu0 0.0
    %641 = vmatpush2.msra.mxu0 0.0
    %642 = vmatprep.subr.mxu0 0.0
    %643 = vmatpush2.msra.mxu0 0.0
    %644 = vmatprep.subr.mxu0 0.0
    %645 = vmatpush2.msra.mxu0 0.0
    %646 = vmatprep.subr.mxu0 0.0
    %647 = vmatpush2.msra.mxu0 0.0
    %648 = vmatprep.mubr.f32.mxu0 0.0
    %649 = vmatmul.mubr.f32.gmra.mxu0 %v319
    %v650 = vpop.f32.mrf.mxu0
    %v651 = vadd.f32 0.0, %v650
    %v652 = vpop.f32.mrf.mxu0
    %653 = vmatprep.mubr.f32.mxu0 0.0
    %654 = vmatmul.mubr.f32.gmra.mxu0 %v322
    %v655 = vpop.f32.mrf.mxu0
    %v656 = vadd.f32 0.0, %v655
    %v657 = vpop.f32.mrf.mxu0
    %658 = vdwg.mxu0
    %v659 = vld [vmem:[%s5] sm:$0xff]
    %v660 = vld [vmem:[%s5 + $0x8] sm:$0xff]
    %v661 = vld [vmem:[%s5 + $0x10] sm:$0xff]
    %v662 = vld [vmem:[%s5 + $0x18] sm:$0xff]
    %v664 = vsel %vm403, %v576, 0
    %v667 = vsel %vm403, %v581, 0
    %v670 = vsel %vm403, %v651, 0
    %v673 = vsel %vm403, %v656, 0
    %675 = vmatprep.subr.mxu0 0.0
    %676 = vmatpush1.msra.mxu0 0.0
    %677 = vmatprep.subr.mxu0 0.0
    %678 = vmatpush1.msra.mxu0 0.0
    %679 = vmatprep.subr.mxu0 0.0
    %680 = vmatpush1.msra.mxu0 0.0
    %681 = vmatprep.subr.mxu0 0.0
    %682 = vmatpush1.msra.mxu0 0.0
    %683 = vmatprep.subr.mxu0 0.0
    %684 = vmatpush1.msra.mxu0 0.0
    %685 = vmatprep.subr.mxu0 0.0
    %686 = vmatpush1.msra.mxu0 0.0
    %687 = vmatprep.subr.mxu0 0.0
    %688 = vmatpush1.msra.mxu0 0.0
    %689 = vmatprep.subr.mxu0 0.0
    %690 = vmatpush1.msra.mxu0 0.0
    %691 = vmatprep.subr.mxu0 0.0
    %692 = vmatpush1.msra.mxu0 0.0
    %693 = vmatprep.subr.mxu0 0.0
    %694 = vmatpush1.msra.mxu0 0.0
    %695 = vmatprep.subr.mxu0 0.0
    %696 = vmatpush1.msra.mxu0 0.0
    %697 = vmatprep.subr.mxu0 0.0
    %698 = vmatpush1.msra.mxu0 0.0
    %699 = vmatprep.subr.mxu0 0.0
    %700 = vmatpush1.msra.mxu0 %v662
    %701 = vmatprep.subr.mxu0 0.0
    %702 = vmatpush1.msra.mxu0 %v661
    %703 = vmatprep.subr.mxu0 0.0
    %704 = vmatpush1.msra.mxu0 %v660
    %705 = vmatprep.subr.mxu0 0.0
    %706 = vmatpush1.msra.mxu0 %v659
    %707 = vmatprep.subr.mxu0 0.0
    %708 = vmatpush2.msra.mxu0 0.0
    %709 = vmatprep.subr.mxu0 0.0
    %710 = vmatpush2.msra.mxu0 0.0
    %711 = vmatprep.subr.mxu0 0.0
    %712 = vmatpush2.msra.mxu0 0.0
    %713 = vmatprep.subr.mxu0 0.0
    %714 = vmatpush2.msra.mxu0 0.0
    %715 = vmatprep.subr.mxu0 0.0
    %716 = vmatpush2.msra.mxu0 0.0
    %717 = vmatprep.subr.mxu0 0.0
    %718 = vmatpush2.msra.mxu0 0.0
    %719 = vmatprep.subr.mxu0 0.0
    %720 = vmatpush2.msra.mxu0 0.0
    %721 = vmatprep.subr.mxu0 0.0
    %722 = vmatpush2.msra.mxu0 0.0
    %723 = vmatprep.subr.mxu0 0.0
    %724 = vmatpush2.msra.mxu0 0.0
    %725 = vmatprep.subr.mxu0 0.0
    %726 = vmatpush2.msra.mxu0 0.0
    %727 = vmatprep.subr.mxu0 0.0
    %728 = vmatpush2.msra.mxu0 0.0
    %729 = vmatprep.subr.mxu0 0.0
    %730 = vmatpush2.msra.mxu0 0.0
    %731 = vmatprep.subr.mxu0 0.0
    %732 = vmatpush2.msra.mxu0 0.0
    %733 = vmatprep.subr.mxu0 0.0
    %734 = vmatpush2.msra.mxu0 0.0
    %735 = vmatprep.subr.mxu0 0.0
    %736 = vmatpush2.msra.mxu0 0.0
    %737 = vmatprep.subr.mxu0 0.0
    %738 = vmatpush2.msra.mxu0 0.0
    %739 = vmatprep.mubr.f32.mxu0 0.0
    %740 = vmatmul.mubr.f32.gmra.mxu0 %v664
    %v741 = vpop.f32.mrf.mxu0
    %v742 = vadd.f32 0.0, %v741
    %v743 = vpop.f32.mrf.mxu0
    %744 = vmatprep.mubr.f32.mxu0 0.0
    %745 = vmatmul.mubr.f32.gmra.mxu0 %v667
    %v746 = vpop.f32.mrf.mxu0
    %v747 = vadd.f32 0.0, %v746
    %v748 = vpop.f32.mrf.mxu0
    %749 = vmatprep.mubr.f32.mxu0 0.0
    %750 = vmatmul.mubr.f32.gmra.mxu0 %v670
    %v751 = vpop.f32.mrf.mxu0
    %v752 = vadd.f32 0.0, %v751
    %v753 = vpop.f32.mrf.mxu0
    %754 = vmatprep.mubr.f32.mxu0 0.0
    %755 = vmatmul.mubr.f32.gmra.mxu0 %v673
    %v756 = vpop.f32.mrf.mxu0
    %v757 = vadd.f32 0.0, %v756
    %v758 = vpop.f32.mrf.mxu0
    %759 = vdwg.mxu0
    %v760 = vadd.f32 %v229, %v742
    %v761 = vadd.f32 %v230, %v747
    %v762 = vadd.f32 %v231, %v752
    %v763 = vadd.f32 %v232, %v757
    %v764 = vmax.f32 %v760, 0.0
    %v765 = vmax.f32 %v761, 0.0
    %v766 = vmax.f32 %v762, 0.0
    %v767 = vmax.f32 %v763, 0.0
    %v768 = vld [vmem:[#allocation8] sm:$0xff]
    %v769 = vld [vmem:[#allocation8 + $0x8] sm:$0xff]
    %v770 = vld [vmem:[#allocation8 + $0x10] sm:$0xff]
    %v771 = vld [vmem:[#allocation8 + $0x18] sm:$0xff]
    %v773 = vsel %vm403, %v764, 0
    %v776 = vsel %vm403, %v765, 0
    %v779 = vsel %vm403, %v766, 0
    %v782 = vsel %vm403, %v767, 0
    %784 = vmatprep.subr.mxu0 0.0
    %785 = vmatpush1.msra.mxu0 0.0
    %786 = vmatprep.subr.mxu0 0.0
    %787 = vmatpush1.msra.mxu0 0.0
    %788 = vmatprep.subr.mxu0 0.0
    %789 = vmatpush1.msra.mxu0 0.0
    %790 = vmatprep.subr.mxu0 0.0
    %791 = vmatpush1.msra.mxu0 0.0
    %792 = vmatprep.subr.mxu0 0.0
    %793 = vmatpush1.msra.mxu0 0.0
    %794 = vmatprep.subr.mxu0 0.0
    %795 = vmatpush1.msra.mxu0 0.0
    %796 = vmatprep.subr.mxu0 0.0
    %797 = vmatpush1.msra.mxu0 0.0
    %798 = vmatprep.subr.mxu0 0.0
    %799 = vmatpush1.msra.mxu0 0.0
    %800 = vmatprep.subr.mxu0 0.0
    %801 = vmatpush1.msra.mxu0 0.0
    %802 = vmatprep.subr.mxu0 0.0
    %803 = vmatpush1.msra.mxu0 0.0
    %804 = vmatprep.subr.mxu0 0.0
    %805 = vmatpush1.msra.mxu0 0.0
    %806 = vmatprep.subr.mxu0 0.0
    %807 = vmatpush1.msra.mxu0 0.0
    %808 = vmatprep.subr.mxu0 0.0
    %809 = vmatpush1.msra.mxu0 %v771
    %810 = vmatprep.subr.mxu0 0.0
    %811 = vmatpush1.msra.mxu0 %v770
    %812 = vmatprep.subr.mxu0 0.0
    %813 = vmatpush1.msra.mxu0 %v769
    %814 = vmatprep.subr.mxu0 0.0
    %815 = vmatpush1.msra.mxu0 %v768
    %816 = vmatprep.subr.mxu0 0.0
    %817 = vmatpush2.msra.mxu0 0.0
    %818 = vmatprep.subr.mxu0 0.0
    %819 = vmatpush2.msra.mxu0 0.0
    %820 = vmatprep.subr.mxu0 0.0
    %821 = vmatpush2.msra.mxu0 0.0
    %822 = vmatprep.subr.mxu0 0.0
    %823 = vmatpush2.msra.mxu0 0.0
    %824 = vmatprep.subr.mxu0 0.0
    %825 = vmatpush2.msra.mxu0 0.0
    %826 = vmatprep.subr.mxu0 0.0
    %827 = vmatpush2.msra.mxu0 0.0
    %828 = vmatprep.subr.mxu0 0.0
    %829 = vmatpush2.msra.mxu0 0.0
    %830 = vmatprep.subr.mxu0 0.0
    %831 = vmatpush2.msra.mxu0 0.0
    %832 = vmatprep.subr.mxu0 0.0
    %833 = vmatpush2.msra.mxu0 0.0
    %834 = vmatprep.subr.mxu0 0.0
    %835 = vmatpush2.msra.mxu0 0.0
    %836 = vmatprep.subr.mxu0 0.0
    %837 = vmatpush2.msra.mxu0 0.0
    %838 = vmatprep.subr.mxu0 0.0
    %839 = vmatpush2.msra.mxu0 0.0
    %840 = vmatprep.subr.mxu0 0.0
    %841 = vmatpush2.msra.mxu0 0.0
    %842 = vmatprep.subr.mxu0 0.0
    %843 = vmatpush2.msra.mxu0 0.0
    %844 = vmatprep.subr.mxu0 0.0
    %845 = vmatpush2.msra.mxu0 0.0
    %846 = vmatprep.subr.mxu0 0.0
    %847 = vmatpush2.msra.mxu0 0.0
    %848 = vmatprep.mubr.f32.mxu0 0.0
    %849 = vmatmul.mubr.f32.gmra.mxu0 %v773
    %v850 = vpop.f32.mrf.mxu0
    %v851 = vadd.f32 0.0, %v850
    %v852 = vpop.f32.mrf.mxu0
    %853 = vmatprep.mubr.f32.mxu0 0.0
    %854 = vmatmul.mubr.f32.gmra.mxu0 %v776
    %v855 = vpop.f32.mrf.mxu0
    %v856 = vadd.f32 0.0, %v855
    %v857 = vpop.f32.mrf.mxu0
    %858 = vmatprep.mubr.f32.mxu0 0.0
    %859 = vmatmul.mubr.f32.gmra.mxu0 %v779
    %v860 = vpop.f32.mrf.mxu0
    %v861 = vadd.f32 0.0, %v860
    %v862 = vpop.f32.mrf.mxu0
    %863 = vmatprep.mubr.f32.mxu0 0.0
    %864 = vmatmul.mubr.f32.gmra.mxu0 %v782
    %v865 = vpop.f32.mrf.mxu0
    %v866 = vadd.f32 0.0, %v865
    %v867 = vpop.f32.mrf.mxu0
    %868 = vdwg.mxu0
    %v870 = vsel %vm140, %v235, 0
    %872 = vmatprep.subr.mxu0 0.0
    %873 = vmatpush1.msra.mxu0 0.0
    %874 = vmatprep.subr.mxu0 0.0
    %875 = vmatpush1.msra.mxu0 0.0
    %876 = vmatprep.subr.mxu0 0.0
    %877 = vmatpush1.msra.mxu0 0.0
    %878 = vmatprep.subr.mxu0 0.0
    %879 = vmatpush1.msra.mxu0 0.0
    %880 = vmatprep.subr.mxu0 0.0
    %881 = vmatpush1.msra.mxu0 0.0
    %882 = vmatprep.subr.mxu0 0.0
    %883 = vmatpush1.msra.mxu0 0.0
    %884 = vmatprep.subr.mxu0 0.0
    %885 = vmatpush1.msra.mxu0 0.0
    %886 = vmatprep.subr.mxu0 0.0
    %887 = vmatpush1.msra.mxu0 0.0
    %888 = vmatprep.subr.mxu0 0.0
    %889 = vmatpush1.msra.mxu0 0.0
    %890 = vmatprep.subr.mxu0 0.0
    %891 = vmatpush1.msra.mxu0 0.0
    %892 = vmatprep.subr.mxu0 0.0
    %893 = vmatpush1.msra.mxu0 0.0
    %894 = vmatprep.subr.mxu0 0.0
    %895 = vmatpush1.msra.mxu0 0.0
    %896 = vmatprep.subr.mxu0 0.0
    %897 = vmatpush1.msra.mxu0 0.0
    %898 = vmatprep.subr.mxu0 0.0
    %899 = vmatpush1.msra.mxu0 %v870
    %900 = vmatprep.subr.mxu0 0.0
    %901 = vmatpush1.msra.mxu0 %v234
    %902 = vmatprep.subr.mxu0 0.0
    %903 = vmatpush1.msra.mxu0 %v233
    %904 = vmatprep.subr.mxu0 0.0
    %905 = vmatpush2.msra.mxu0 0.0
    %906 = vmatprep.subr.mxu0 0.0
    %907 = vmatpush2.msra.mxu0 0.0
    %908 = vmatprep.subr.mxu0 0.0
    %909 = vmatpush2.msra.mxu0 0.0
    %910 = vmatprep.subr.mxu0 0.0
    %911 = vmatpush2.msra.mxu0 0.0
    %912 = vmatprep.subr.mxu0 0.0
    %913 = vmatpush2.msra.mxu0 0.0
    %914 = vmatprep.subr.mxu0 0.0
    %915 = vmatpush2.msra.mxu0 0.0
    %916 = vmatprep.subr.mxu0 0.0
    %917 = vmatpush2.msra.mxu0 0.0
    %918 = vmatprep.subr.mxu0 0.0
    %919 = vmatpush2.msra.mxu0 0.0
    %920 = vmatprep.subr.mxu0 0.0
    %921 = vmatpush2.msra.mxu0 0.0
    %922 = vmatprep.subr.mxu0 0.0
    %923 = vmatpush2.msra.mxu0 0.0
    %924 = vmatprep.subr.mxu0 0.0
    %925 = vmatpush2.msra.mxu0 0.0
    %926 = vmatprep.subr.mxu0 0.0
    %927 = vmatpush2.msra.mxu0 0.0
    %928 = vmatprep.subr.mxu0 0.0
    %929 = vmatpush2.msra.mxu0 0.0
    %930 = vmatprep.subr.mxu0 0.0
    %931 = vmatpush2.msra.mxu0 0.0
    %932 = vmatprep.subr.mxu0 0.0
    %933 = vmatpush2.msra.mxu0 0.0
    %934 = vmatprep.subr.mxu0 0.0
    %935 = vmatpush2.msra.mxu0 0.0
    %936 = vmatprep.mubr.f32.mxu0 0.0
    %937 = vmatmul.mubr.f32.gmra.mxu0 %v129
    %v938 = vpop.f32.mrf.mxu0
    %v939 = vadd.f32 %v851, %v938
    %v940 = vpop.f32.mrf.mxu0
    %941 = vmatprep.mubr.f32.mxu0 0.0
    %942 = vmatmul.mubr.f32.gmra.mxu0 %v132
    %v943 = vpop.f32.mrf.mxu0
    %v944 = vadd.f32 %v856, %v943
    %v945 = vpop.f32.mrf.mxu0
    %946 = vmatprep.mubr.f32.mxu0 0.0
    %947 = vmatmul.mubr.f32.gmra.mxu0 %v135
    %v948 = vpop.f32.mrf.mxu0
    %v949 = vadd.f32 %v861, %v948
    %v950 = vpop.f32.mrf.mxu0
    %951 = vmatprep.mubr.f32.mxu0 0.0
    %952 = vmatmul.mubr.f32.gmra.mxu0 %v138
    %v953 = vpop.f32.mrf.mxu0
    %v954 = vadd.f32 %v866, %v953
    %v955 = vpop.f32.mrf.mxu0
    %956 = vdwg.mxu0
    %v957 = vmax.f32 %v939, 0.0
    %v958 = vmax.f32 %v944, 0.0
    %v959 = vmax.f32 %v949, 0.0
    %v960 = vmax.f32 %v954, 0.0
    %v961 = vld [vmem:[#allocation2] sm:$0x3]
    %v963 = vsel %vm403, %v961, 0
    %965 = vmatprep.subr.mxu0 0.0
    %966 = vmatpush1.msra.mxu0 0.0
    %967 = vmatprep.subr.mxu0 0.0
    %968 = vmatpush1.msra.mxu0 0.0
    %969 = vmatprep.subr.mxu0 0.0
    %970 = vmatpush1.msra.mxu0 0.0
    %971 = vmatprep.subr.mxu0 0.0
    %972 = vmatpush1.msra.mxu0 0.0
    %973 = vmatprep.subr.mxu0 0.0
    %974 = vmatpush1.msra.mxu0 0.0
    %975 = vmatprep.subr.mxu0 0.0
    %976 = vmatpush1.msra.mxu0 0.0
    %977 = vmatprep.subr.mxu0 0.0
    %978 = vmatpush1.msra.mxu0 0.0
    %979 = vmatprep.subr.mxu0 0.0
    %980 = vmatpush1.msra.mxu0 0.0
    %981 = vmatprep.subr.mxu0 0.0
    %982 = vmatpush1.msra.mxu0 0.0
    %983 = vmatprep.subr.mxu0 0.0
    %984 = vmatpush1.msra.mxu0 0.0
    %985 = vmatprep.subr.mxu0 0.0
    %986 = vmatpush1.msra.mxu0 0.0
    %987 = vmatprep.subr.mxu0 0.0
    %988 = vmatpush1.msra.mxu0 0.0
    %989 = vmatprep.subr.mxu0 0.0
    %990 = vmatpush1.msra.mxu0 %v960
    %991 = vmatprep.subr.mxu0 0.0
    %992 = vmatpush1.msra.mxu0 %v959
    %993 = vmatprep.subr.mxu0 0.0
    %994 = vmatpush1.msra.mxu0 %v958
    %995 = vmatprep.subr.mxu0 0.0
    %996 = vmatpush1.msra.mxu0 %v957
    %997 = vmatprep.subr.mxu0 0.0
    %998 = vmatpush2.msra.mxu0 0.0
    %999 = vmatprep.subr.mxu0 0.0
    %1000 = vmatpush2.msra.mxu0 0.0
    %1001 = vmatprep.subr.mxu0 0.0
    %1002 = vmatpush2.msra.mxu0 0.0
    %1003 = vmatprep.subr.mxu0 0.0
    %1004 = vmatpush2.msra.mxu0 0.0
    %1005 = vmatprep.subr.mxu0 0.0
    %1006 = vmatpush2.msra.mxu0 0.0
    %1007 = vmatprep.subr.mxu0 0.0
    %1008 = vmatpush2.msra.mxu0 0.0
    %1009 = vmatprep.subr.mxu0 0.0
    %1010 = vmatpush2.msra.mxu0 0.0
    %1011 = vmatprep.subr.mxu0 0.0
    %1012 = vmatpush2.msra.mxu0 0.0
    %1013 = vmatprep.subr.mxu0 0.0
    %1014 = vmatpush2.msra.mxu0 0.0
    %1015 = vmatprep.subr.mxu0 0.0
    %1016 = vmatpush2.msra.mxu0 0.0
    %1017 = vmatprep.subr.mxu0 0.0
    %1018 = vmatpush2.msra.mxu0 0.0
    %1019 = vmatprep.subr.mxu0 0.0
    %1020 = vmatpush2.msra.mxu0 0.0
    %1021 = vmatprep.subr.mxu0 0.0
    %1022 = vmatpush2.msra.mxu0 0.0
    %1023 = vmatprep.subr.mxu0 0.0
    %1024 = vmatpush2.msra.mxu0 0.0
    %1025 = vmatprep.subr.mxu0 0.0
    %1026 = vmatpush2.msra.mxu0 0.0
    %1027 = vmatprep.subr.mxu0 0.0
    %1028 = vmatpush2.msra.mxu0 0.0
    %1029 = vmatprep.mubr.f32.mxu0 0.0
    %1030 = vmatmul.mubr.f32.gmra.mxu0 %v963
    %v1031 = vpop.f32.mrf.mxu0
    %v1032 = vadd.f32 0.0, %v1031
    %v1033 = vpop.f32.mrf.mxu0
    %1034 = vdwg.mxu0
    %v1035 = vld [vmem:[%s9] sm:$0x3]
    %v1036 = vld [vmem:[#allocation10] sm:$0xff]
    %v1037 = vld [vmem:[#allocation10 + $0x8] sm:$0xff]
    %v1038 = vld [vmem:[#allocation10 + $0x10] sm:$0xff]
    %v1039 = vld [vmem:[#allocation10 + $0x18] sm:$0xff]
    %v1040 = vlaneseq
    %v1041 = vshrl.u32 %v1040, 7
    %v1042 = vsub.s32 0, %v1041
    %v1043 = vrot.slane %v1035, %v1042
    %v1045 = vsel %vm403, %v1032, 0
    %1047 = vmatprep.subr.mxu0 0.0
    %1048 = vmatpush1.msra.mxu0 0.0
    %1049 = vmatprep.subr.mxu0 0.0
    %1050 = vmatpush1.msra.mxu0 0.0
    %1051 = vmatprep.subr.mxu0 0.0
    %1052 = vmatpush1.msra.mxu0 0.0
    %1053 = vmatprep.subr.mxu0 0.0
    %1054 = vmatpush1.msra.mxu0 0.0
    %1055 = vmatprep.subr.mxu0 0.0
    %1056 = vmatpush1.msra.mxu0 0.0
    %1057 = vmatprep.subr.mxu0 0.0
    %1058 = vmatpush1.msra.mxu0 0.0
    %1059 = vmatprep.subr.mxu0 0.0
    %1060 = vmatpush1.msra.mxu0 0.0
    %1061 = vmatprep.subr.mxu0 0.0
    %1062 = vmatpush1.msra.mxu0 0.0
    %1063 = vmatprep.subr.mxu0 0.0
    %1064 = vmatpush1.msra.mxu0 0.0
    %1065 = vmatprep.subr.mxu0 0.0
    %1066 = vmatpush1.msra.mxu0 0.0
    %1067 = vmatprep.subr.mxu0 0.0
    %1068 = vmatpush1.msra.mxu0 0.0
    %1069 = vmatprep.subr.mxu0 0.0
    %1070 = vmatpush1.msra.mxu0 0.0
    %1071 = vmatprep.subr.mxu0 0.0
    %1072 = vmatpush1.msra.mxu0 %v1039
    %1073 = vmatprep.subr.mxu0 0.0
    %1074 = vmatpush1.msra.mxu0 %v1038
    %1075 = vmatprep.subr.mxu0 0.0
    %1076 = vmatpush1.msra.mxu0 %v1037
    %1077 = vmatprep.subr.mxu0 0.0
    %1078 = vmatpush1.msra.mxu0 %v1036
    %1079 = vmatprep.subr.mxu0 0.0
    %1080 = vmatpush2.msra.mxu0 0.0
    %1081 = vmatprep.subr.mxu0 0.0
    %1082 = vmatpush2.msra.mxu0 0.0
    %1083 = vmatprep.subr.mxu0 0.0
    %1084 = vmatpush2.msra.mxu0 0.0
    %1085 = vmatprep.subr.mxu0 0.0
    %1086 = vmatpush2.msra.mxu0 0.0
    %1087 = vmatprep.subr.mxu0 0.0
    %1088 = vmatpush2.msra.mxu0 0.0
    %1089 = vmatprep.subr.mxu0 0.0
    %1090 = vmatpush2.msra.mxu0 0.0
    %1091 = vmatprep.subr.mxu0 0.0
    %1092 = vmatpush2.msra.mxu0 0.0
    %1093 = vmatprep.subr.mxu0 0.0
    %1094 = vmatpush2.msra.mxu0 0.0
    %1095 = vmatprep.subr.mxu0 0.0
    %1096 = vmatpush2.msra.mxu0 0.0
    %1097 = vmatprep.subr.mxu0 0.0
    %1098 = vmatpush2.msra.mxu0 0.0
    %1099 = vmatprep.subr.mxu0 0.0
    %1100 = vmatpush2.msra.mxu0 0.0
    %1101 = vmatprep.subr.mxu0 0.0
    %1102 = vmatpush2.msra.mxu0 0.0
    %1103 = vmatprep.subr.mxu0 0.0
    %1104 = vmatpush2.msra.mxu0 0.0
    %1105 = vmatprep.subr.mxu0 0.0
    %1106 = vmatpush2.msra.mxu0 0.0
    %1107 = vmatprep.subr.mxu0 0.0
    %1108 = vmatpush2.msra.mxu0 0.0
    %1109 = vmatprep.subr.mxu0 0.0
    %1110 = vmatpush2.msra.mxu0 0.0
    %1111 = vmatprep.mubr.f32.mxu0 0.0
    %1112 = vmatmul.mubr.f32.gmra.mxu0 %v1045
    %v1113 = vpop.f32.mrf.mxu0
    %v1114 = vadd.f32 %v1043, %v1113
    %v1115 = vpop.f32.mrf.mxu0
    %1116 = vdwg.mxu0
    %v1117 = vmax.f32 %v1114, 0.0
    %v1118 = vld [vmem:[#allocation11] sm:$0xff]
    %v1119 = vld [vmem:[#allocation11 + $0x8] sm:$0xff]
    %v1120 = vld [vmem:[#allocation11 + $0x10] sm:$0xff]
    %v1121 = vld [vmem:[#allocation11 + $0x18] sm:$0xff]
    %v1122 = vld [vmem:[#allocation11 + $0x20] sm:$0xff]
    %v1123 = vld [vmem:[#allocation11 + $0x28] sm:$0xff]
    %v1124 = vld [vmem:[#allocation11 + $0x30] sm:$0xff]
    %v1125 = vld [vmem:[#allocation11 + $0x38] sm:$0xff]
    %v1126 = vld [vmem:[#allocation11 + $0x40] sm:$0xff]
    %v1127 = vld [vmem:[#allocation11 + $0x48] sm:$0xff]
    %v1128 = vld [vmem:[#allocation11 + $0x50] sm:$0xff]
    %v1129 = vld [vmem:[#allocation11 + $0x58] sm:$0xff]
    %v1130 = vld [vmem:[#allocation11 + $0x60] sm:$0xff]
    %v1131 = vld [vmem:[#allocation11 + $0x68] sm:$0xff]
    %v1132 = vld [vmem:[#allocation11 + $0x70] sm:$0xff]
    %v1133 = vld [vmem:[#allocation11 + $0x78] sm:$0xff]
    %v1134 = vlaneseq
    %v1135 = vshrl.u32 %v1134, 7
    %v1136 = vsub.s32 1, %v1135
    %v1137 = vrot.slane %v1035, %v1136
    %1138 = vmatprep.subr.mxu0 0.0
    %1139 = vmatpush1.msra.mxu0 %v1133
    %1140 = vmatprep.subr.mxu0 0.0
    %1141 = vmatpush1.msra.mxu0 %v1132
    %1142 = vmatprep.subr.mxu0 0.0
    %1143 = vmatpush1.msra.mxu0 %v1131
    %1144 = vmatprep.subr.mxu0 0.0
    %1145 = vmatpush1.msra.mxu0 %v1130
    %1146 = vmatprep.subr.mxu0 0.0
    %1147 = vmatpush1.msra.mxu0 %v1129
    %1148 = vmatprep.subr.mxu0 0.0
    %1149 = vmatpush1.msra.mxu0 %v1128
    %1150 = vmatprep.subr.mxu0 0.0
    %1151 = vmatpush1.msra.mxu0 %v1127
    %1152 = vmatprep.subr.mxu0 0.0
    %1153 = vmatpush1.msra.mxu0 %v1126
    %1154 = vmatprep.subr.mxu0 0.0
    %1155 = vmatpush1.msra.mxu0 %v1125
    %1156 = vmatprep.subr.mxu0 0.0
    %1157 = vmatpush1.msra.mxu0 %v1124
    %1158 = vmatprep.subr.mxu0 0.0
    %1159 = vmatpush1.msra.mxu0 %v1123
    %1160 = vmatprep.subr.mxu0 0.0
    %1161 = vmatpush1.msra.mxu0 %v1122
    %1162 = vmatprep.subr.mxu0 0.0
    %1163 = vmatpush1.msra.mxu0 %v1121
    %1164 = vmatprep.subr.mxu0 0.0
    %1165 = vmatpush1.msra.mxu0 %v1120
    %1166 = vmatprep.subr.mxu0 0.0
    %1167 = vmatpush1.msra.mxu0 %v1119
    %1168 = vmatprep.subr.mxu0 0.0
    %1169 = vmatpush1.msra.mxu0 %v1118
    %1170 = vmatprep.subr.mxu0 0.0
    %1171 = vmatpush2.msra.mxu0 0.0
    %1172 = vmatprep.subr.mxu0 0.0
    %1173 = vmatpush2.msra.mxu0 0.0
    %1174 = vmatprep.subr.mxu0 0.0
    %1175 = vmatpush2.msra.mxu0 0.0
    %1176 = vmatprep.subr.mxu0 0.0
    %1177 = vmatpush2.msra.mxu0 0.0
    %1178 = vmatprep.subr.mxu0 0.0
    %1179 = vmatpush2.msra.mxu0 0.0
    %1180 = vmatprep.subr.mxu0 0.0
    %1181 = vmatpush2.msra.mxu0 0.0
    %1182 = vmatprep.subr.mxu0 0.0
    %1183 = vmatpush2.msra.mxu0 0.0
    %1184 = vmatprep.subr.mxu0 0.0
    %1185 = vmatpush2.msra.mxu0 0.0
    %1186 = vmatprep.subr.mxu0 0.0
    %1187 = vmatpush2.msra.mxu0 0.0
    %1188 = vmatprep.subr.mxu0 0.0
    %1189 = vmatpush2.msra.mxu0 0.0
    %1190 = vmatprep.subr.mxu0 0.0
    %1191 = vmatpush2.msra.mxu0 0.0
    %1192 = vmatprep.subr.mxu0 0.0
    %1193 = vmatpush2.msra.mxu0 0.0
    %1194 = vmatprep.subr.mxu0 0.0
    %1195 = vmatpush2.msra.mxu0 0.0
    %1196 = vmatprep.subr.mxu0 0.0
    %1197 = vmatpush2.msra.mxu0 0.0
    %1198 = vmatprep.subr.mxu0 0.0
    %1199 = vmatpush2.msra.mxu0 0.0
    %1200 = vmatprep.subr.mxu0 0.0
    %1201 = vmatpush2.msra.mxu0 0.0
    %1202 = vmatprep.mubr.f32.mxu0 0.0
    %1203 = vmatmul.mubr.f32.gmra.mxu0 %v1117
    %v1204 = vpop.f32.mrf.mxu0
    %v1205 = vadd.f32 %v1137, %v1204
    %v1206 = vpop.f32.mrf.mxu0
    %1207 = vdwg.mxu0
    %v1208 = vxor.u32 %v1205, 2147483648
    %v1209 = vmul.f32 %v1208, 1.442695
    %v1210 = vpow.pop %v1209
    %v1211 = vadd.f32 %v1210, 1.0
    %v1212 = vrcp.pop %v1211
    %v1213 = vmul.f32 1.0, %v1212
    %1214 = vst [vmem:[#allocation13] sm:$0x3] %v1213
    // Predicated region
    $region66: #{tpu_custom_call.1} parent=1 // pred_check
      _
    $region67: #{tpu_custom_call.1} parent=1 // pred_check_branch
      %1216 = sbr.rel (0) target = $region69
    $region68: #{tpu_custom_call.1} parent=1 // pred_region
      %s1218 = ssub.s32 32, 32
      %1219 = vsyncadd [#allocation4], %s1218
      %s1221 = sshll.u32 [#allocation13], 4
      %s1222 = int_to_ptr.vmem [resolvable:$true] %s1221
      %1224 = dma.vmem_to_hbm [thread:$0]  %s1222, 32, %s10, [#allocation4]
    $region69: #{tpu_custom_call.1} parent=1 // pred_fallthru
      _
    // Predicated region
    $region70: #{tpu_custom_call.1} parent=1 // pred_check
      _
    $region71: #{tpu_custom_call.1} parent=1 // pred_check_branch
      %1226 = sbr.rel (0) target = $region73
    $region72: #{tpu_custom_call.1} parent=1 // pred_region
      %1227 = dma.done [#allocation4], 32
    $region73: #{tpu_custom_call.1} parent=1 // pred_fallthru
      _
    %1228 = vsyncpa [#allocation3], 1
    %1229 = vsyncpa [#allocation6], 1
    %1230 = vsyncpa [#allocation9], 1
    %1231 = vsyncpa [#allocation12], 1
    %1232 = vsyncpa [#allocation4], 1

</llo_original>
